<compile_context>
chip_gen: v7x
topology: tpu7x:2x2x1
jax: 0.10.0
libtpu: 0.0.40
codegen_flags: <defaults>
</compile_context>

<pallas_src>
import jax
import jax.numpy as jnp
from jax import lax
from jax.experimental import pallas as pl
from jax.experimental.pallas import tpu as pltpu


_CONTRACT_LAST = (((1,), (1,)), ((), ()))   # contract on the shared last axis


def _lora_kernel_f32(x_ref, w_ref, b_ref, xa_ref, bl_ref, o_ref):
    """f32 output: accumulate straight into o_ref (resident across the K axis)."""
    k = pl.program_id(2)

    @pl.when(k == 0)
    def _init():
        bias = jnp.broadcast_to(b_ref[...].astype(jnp.float32), o_ref.shape)
        lora = lax.dot_general(                   # (tm, r) . (tn, r) -> (tm, tn)
            xa_ref[...], bl_ref[...], _CONTRACT_LAST,
            preferred_element_type=jnp.float32)
        o_ref[...] = bias + lora

    o_ref[...] += lax.dot_general(                # (tm, tk) . (tn, tk) -> (tm, tn)
        x_ref[...], w_ref[...], _CONTRACT_LAST,
        preferred_element_type=jnp.float32)


def _lora_kernel_acc(x_ref, w_ref, b_ref, xa_ref, bl_ref, o_ref, acc_ref):
    """Non-f32 output: f32 scratch accumulator, cast on the last K step."""
    k = pl.program_id(2)
    nk = pl.num_programs(2)

    @pl.when(k == 0)
    def _init():
        bias = jnp.broadcast_to(b_ref[...].astype(jnp.float32), acc_ref.shape)
        lora = lax.dot_general(
            xa_ref[...], bl_ref[...], _CONTRACT_LAST,
            preferred_element_type=jnp.float32)
        acc_ref[...] = bias + lora

    acc_ref[...] += lax.dot_general(
        x_ref[...], w_ref[...], _CONTRACT_LAST,
        preferred_element_type=jnp.float32)

    @pl.when(k == nk - 1)
    def _finalize():
        o_ref[...] = acc_ref[...].astype(o_ref.dtype)


def _round_up(v, m):
    return (v + m - 1) // m * m


def _pick_tile(dim, max_tile, base):
    """Return (padded_dim, tile).

    The dim is first aligned to `base` (8 for sublanes, 128 for lanes).  If it
    fits in one block, use the full extent.  Otherwise pick a tile (multiple
    of `base`, between max_tile/4 and max_tile) minimizing residual padding,
    preferring the largest such tile.
    """
    aligned = _round_up(dim, base)
    if aligned <= max_tile:
        return aligned, aligned
    min_tile = max(base, (max_tile // 4) // base * base)
    best_t, best_pad = None, None
    t = (max_tile // base) * base
    while t >= min_tile:
        pad = _round_up(aligned, t) - aligned
        if best_pad is None or pad < best_pad:
            best_pad, best_t = pad, t
            if pad == 0:
                break
        t -= base
    return aligned + best_pad, best_t


def _pad2(a, p0, p1):
    if p0 == 0 and p1 == 0:
        return a
    return jnp.pad(a, ((0, p0), (0, p1)))


def linear_with_lora(x, weight, bias, lora_A, lora_B, *, alpha=1.0, rank=None,
                     tm=1024, tn=1024, tk=512):
    """x: (..., in_features) -> (..., out_features)."""
    out_features, in_features = weight.shape
    r = lora_A.shape[0]
    if rank is not None:
        assert rank == r, "rank argument must match lora_A.shape[0]"
    scale = float(alpha) / float(r)

    lead_shape = x.shape[:-1]
    x2d = x.reshape(-1, in_features)
    M = x2d.shape[0]

    if bias is None:
        bias = jnp.zeros((out_features,), dtype=x.dtype)

    # Hoisted rank-r projection: tiny (M, K, r) GEMM, scale folded in here so
    # the kernel's epilogue is just one (tm, r) x (tn, r) dot per output tile.
    xa = lax.dot_general(x2d, lora_A, _CONTRACT_LAST,
                         precision=lax.Precision.HIGHEST,
                         preferred_element_type=jnp.float32)
    xa = (xa * scale).astype(x.dtype)                       # (M, r)

    # Alignment-only padding (no rounding up to tile multiples).
    Mp, tm_e = _pick_tile(M, tm, 8)
    Np, tn_e = _pick_tile(out_features, tn, 128)
    Kp, tk_e = _pick_tile(in_features, tk, 128)

    # If the parallel (M, N) grid is 1x1, split a dim so v7x's 2nd TC has work.
    if (Mp // tm_e) * (Np // tn_e) == 1:
        if tn_e % 256 == 0:
            tn_e //= 2
        elif tm_e % 16 == 0:
            tm_e //= 2

    x_p = _pad2(x2d, Mp - M, Kp - in_features)
    w_p = _pad2(weight, Np - out_features, Kp - in_features)
    xa_p = _pad2(xa, Mp - M, 0)
    bl_p = _pad2(lora_B, Np - out_features, 0)
    b_p = bias if Np == out_features else jnp.pad(bias, (0, Np - out_features))
    b_p = b_p.reshape(1, Np)

    grid = (Mp // tm_e, Np // tn_e, Kp // tk_e)
    out_dtype = x.dtype

    if out_dtype == jnp.float32:
        kernel = _lora_kernel_f32
        scratch_shapes = []
    else:
        kernel = _lora_kernel_acc
        scratch_shapes = [pltpu.VMEM((tm_e, tn_e), jnp.float32)]

    itemsize = jnp.dtype(x.dtype).itemsize
    cost = pl.CostEstimate(
        flops=int(2 * Mp * Np * Kp + 2 * Mp * Np * r),
        transcendentals=0,
        bytes_accessed=int(
            Mp * Kp * itemsize * (Np // tn_e)        # x, re-read per N tile
            + Np * Kp * itemsize * (Mp // tm_e)      # W, re-read per M tile
            + Mp * Np * jnp.dtype(out_dtype).itemsize
            + (Mp * r + Np * r + Np) * itemsize),
    )

    out_p = pl.pallas_call(
        kernel,
        out_shape=jax.ShapeDtypeStruct((Mp, Np), out_dtype),
        grid_spec=pltpu.PrefetchScalarGridSpec(
            num_scalar_prefetch=0,
            grid=grid,
            in_specs=[
                pl.BlockSpec((tm_e, tk_e), lambda i, j, k: (i, k)),   # x
                pl.BlockSpec((tn_e, tk_e), lambda i, j, k: (j, k)),   # W
                pl.BlockSpec((1, tn_e), lambda i, j, k: (0, j)),      # bias
                pl.BlockSpec((tm_e, r), lambda i, j, k: (i, 0)),      # (x@A.T)*s
                pl.BlockSpec((tn_e, r), lambda i, j, k: (j, 0)),      # B
            ],
            out_specs=pl.BlockSpec((tm_e, tn_e), lambda i, j, k: (i, j)),
            scratch_shapes=scratch_shapes,
        ),
        compiler_params=pltpu.CompilerParams(
            dimension_semantics=("parallel", "parallel", "arbitrary"),
            vmem_limit_bytes=48 * 1024 * 1024),
        cost_estimate=cost,
    )(x_p, w_p, b_p, xa_p, bl_p)

    out2d = out_p[:M, :out_features]
    return out2d.reshape(*lead_shape, out_features)


if __name__ == "__main__":
    # Small shapes consistent with the module: batch=2, seq=8,
    # in_features=32, out_features=32, rank=4, alpha=1.0.
    batch, seq = 2, 8
    in_features, out_features = 32, 32
    rank, alpha = 4, 1.0

    key = jax.random.PRNGKey(0)
    kx, kw, kb, ka, kbm = jax.random.split(key, 5)

    x = jax.random.normal(kx, (batch, seq, in_features), dtype=jnp.float32)

    bound = 1.0 / jnp.sqrt(in_features)
    weight = jax.random.uniform(
        kw, (out_features, in_features), dtype=jnp.float32,
        minval=-bound, maxval=bound)
    bias = jax.random.uniform(
        kb, (out_features,), dtype=jnp.float32, minval=-bound, maxval=bound)
    lora_A = jax.random.normal(ka, (rank, in_features), dtype=jnp.float32) * 0.01
    # The module initializes B to zeros; use nonzero values here so the
    # LoRA path is numerically exercised by the check below.
    lora_B = jax.random.normal(
        kbm, (out_features, rank), dtype=jnp.float32) * 0.1

    out = linear_with_lora(x, weight, bias, lora_A, lora_B,
                           rank=rank, alpha=alpha)
    jax.block_until_ready(out)

    # Pure-JAX reference (same semantics as the PyTorch forward).
    with jax.default_matmul_precision("highest"):
        ref = (x @ weight.T + bias) + (x @ lora_A.T @ lora_B.T) * (alpha / rank)
    assert out.shape == (batch, seq, out_features)
    assert jnp.allclose(out, ref, atol=1e-5, rtol=1e-5)

    print("KERNEL_OK")
</pallas_src>

<mosaic_0001>
module attributes {stable_mosaic.version = 11 : i64} {
  func.func @_lora_kernel_f32(%arg0: i32, %arg1: i32, %arg2: i32, %arg3: memref<8x128xf32, #tpu.memory_space<vmem>>, %arg4: memref<128x128xf32, #tpu.memory_space<vmem>>, %arg5: memref<1x128xf32, #tpu.memory_space<vmem>>, %arg6: memref<8x4xf32, #tpu.memory_space<vmem>>, %arg7: memref<128x4xf32, #tpu.memory_space<vmem>>, %arg8: memref<8x128xf32, #tpu.memory_space<vmem>>) attributes {dimension_semantics = [#tpu.dimension_semantics<parallel>, #tpu.dimension_semantics<parallel>, #tpu.dimension_semantics<arbitrary>], iteration_bounds = array<i64: 2, 1, 1>, scalar_prefetch = 0 : i64, scratch_operands = 0 : i64, tpu.core_type = #tpu.core_type<tc>, window_params = [{transform_indices = @transform_0, window_bounds = array<i64: 8, 128>}, {transform_indices = @transform_1, window_bounds = array<i64: 128, 128>}, {transform_indices = @transform_2, window_bounds = array<i64: 1, 128>}, {transform_indices = @transform_3, window_bounds = array<i64: 8, 4>}, {transform_indices = @transform_4, window_bounds = array<i64: 128, 4>}, {transform_indices = @transform_5, window_bounds = array<i64: 8, 128>}]} {
    %c0_i32 = arith.constant 0 : i32
    %0 = arith.cmpi eq, %arg2, %c0_i32 : i32
    %1 = arith.extui %0 : i1 to i32
    %c0_i32_0 = arith.constant 0 : i32
    %2 = arith.cmpi ne, %1, %c0_i32_0 : i32
    scf.if %2 {
      %c0_8 = arith.constant 0 : index
      %c0_9 = arith.constant 0 : index
      %9 = vector.load %arg5[%c0_8, %c0_9] : memref<1x128xf32, #tpu.memory_space<vmem>>, vector<1x128xf32>
      %10 = vector.shape_cast %9 : vector<1x128xf32> to vector<1x128xf32>
      %11 = vector.broadcast %10 : vector<1x128xf32> to vector<8x128xf32>
      %c0_10 = arith.constant 0 : index
      %c0_11 = arith.constant 0 : index
      %12 = vector.load %arg6[%c0_10, %c0_11] : memref<8x4xf32, #tpu.memory_space<vmem>>, vector<8x4xf32>
      %c0_12 = arith.constant 0 : index
      %c0_13 = arith.constant 0 : index
      %13 = vector.load %arg7[%c0_12, %c0_13] : memref<128x4xf32, #tpu.memory_space<vmem>>, vector<128x4xf32>
      %cst_14 = arith.constant dense<0.000000e+00> : vector<8x128xf32>
      %14 = tpu.matmul %12, %13, %cst_14 {dimension_numbers = #tpu.dot_dimension_numbers<[1], [1], [0], [0], [0, 0, 1, 0], [], []>} : vector<8x4xf32>, vector<128x4xf32>, vector<8x128xf32> -> vector<8x128xf32>
      %15 = arith.addf %11, %14 : vector<8x128xf32>
      %c0_15 = arith.constant 0 : index
      %c0_16 = arith.constant 0 : index
      %16 = vector.load %arg8[%c0_15, %c0_16] : memref<8x128xf32, #tpu.memory_space<vmem>>, vector<8x128xf32>
      tpu.vector_store %arg8[%c0_15, %c0_16], %15 {strides = array<i32>} : memref<8x128xf32, #tpu.memory_space<vmem>>, vector<8x128xf32>,
    } else {
    }
    %c0 = arith.constant 0 : index
    %c0_1 = arith.constant 0 : index
    %3 = vector.load %arg8[%c0, %c0_1] : memref<8x128xf32, #tpu.memory_space<vmem>>, vector<8x128xf32>
    %c0_2 = arith.constant 0 : index
    %c0_3 = arith.constant 0 : index
    %4 = vector.load %arg3[%c0_2, %c0_3] : memref<8x128xf32, #tpu.memory_space<vmem>>, vector<8x128xf32>
    %c0_4 = arith.constant 0 : index
    %c0_5 = arith.constant 0 : index
    %5 = vector.load %arg4[%c0_4, %c0_5] : memref<128x128xf32, #tpu.memory_space<vmem>>, vector<128x128xf32>
    %cst = arith.constant dense<0.000000e+00> : vector<8x128xf32>
    %6 = tpu.matmul %4, %5, %cst {dimension_numbers = #tpu.dot_dimension_numbers<[1], [1], [0], [0], [0, 0, 1, 0], [], []>} : vector<8x128xf32>, vector<128x128xf32>, vector<8x128xf32> -> vector<8x128xf32>
    %7 = arith.addf %3, %6 : vector<8x128xf32>
    %c0_6 = arith.constant 0 : index
    %c0_7 = arith.constant 0 : index
    %8 = vector.load %arg8[%c0_6, %c0_7] : memref<8x128xf32, #tpu.memory_space<vmem>>, vector<8x128xf32>
    tpu.vector_store %arg8[%c0_6, %c0_7], %7 {strides = array<i32>} : memref<8x128xf32, #tpu.memory_space<vmem>>, vector<8x128xf32>,
    return
  }
  func.func @transform_0(%arg0: i32, %arg1: i32, %arg2: i32) -> (i32, i32) {
    %c0_i32 = arith.constant 0 : i32
    return %arg0, %arg2 : i32, i32
  }
  func.func @transform_1(%arg0: i32, %arg1: i32, %arg2: i32) -> (i32, i32) {
    %c0_i32 = arith.constant 0 : i32
    return %arg1, %arg2 : i32, i32
  }
  func.func @transform_2(%arg0: i32, %arg1: i32, %arg2: i32) -> (i32, i32) {
    %c0_i32 = arith.constant 0 : i32
    %c0_i32_0 = arith.constant 0 : i32
    return %c0_i32, %arg1 : i32, i32
  }
  func.func @transform_3(%arg0: i32, %arg1: i32, %arg2: i32) -> (i32, i32) {
    %c0_i32 = arith.constant 0 : i32
    %c0_i32_0 = arith.constant 0 : i32
    return %arg0, %c0_i32 : i32, i32
  }
  func.func @transform_4(%arg0: i32, %arg1: i32, %arg2: i32) -> (i32, i32) {
    %c0_i32 = arith.constant 0 : i32
    %c0_i32_0 = arith.constant 0 : i32
    return %arg1, %c0_i32 : i32, i32
  }
  func.func @transform_5(%arg0: i32, %arg1: i32, %arg2: i32) -> (i32, i32) {
    %c0_i32 = arith.constant 0 : i32
    return %arg0, %arg1 : i32, i32
  }
}

</mosaic_0001>

<llo_original>
// kernel: tpu_custom_call.1
$region0: #{tpu_custom_call.1}
  #allocation0 [shape = 'u32[]', space=smem, size = 0x4, offset = 0x4, fixed_abs, tag = 'smem constant byte address 0x4 - core index']
  #allocation1 [shape = 'u32[144,128]{1,0:T(1,128)}', space=vmem, size = 0x12000, scoped, tag = 'internal scratch']
  %s0 = inlined_call_operand.vmem [shape: f32[16,128], index: 0, kind: input, shape index: {}]
  %s1 = inlined_call_operand.vmem [shape: f32[128,128], index: 1, kind: input, shape index: {}]
  %s2 = inlined_call_operand.vmem [shape: f32[1,128], index: 2, kind: input, shape index: {}]
  %s3 = inlined_call_operand.vmem [shape: f32[16,4], index: 3, kind: input, shape index: {}]
  %s4 = inlined_call_operand.vmem [shape: f32[128,4], index: 4, kind: input, shape index: {}]
  %s5 = inlined_call_operand.hbm [shape: f32[16,128], index: 5, kind: output, shape index: {}]
  %s6 = sld [smem:[#allocation0]]
  $region57: #{tpu_custom_call.1} parent=0
    _
  %s8 = ssub.s32 1, %s6
  %s9 = scalar_select 0, %s8, %s6
  $region1: #{tpu_custom_call.1} parent=0
    #allocation2 [shape = 'u8[8192]{0}', space=vmem, size = 0x2000, scoped, tag = 'output window, operand 0']
    #allocation3 [shape = 's32[2]{0}', space=sflag, size = 0x8, scoped, tag = 'scoped memory for tpu_custom_call.1']
    %10 = vsyncpa [#allocation3], 0
    %s11 = scalar_lea.sflag [#allocation3], 1
    %12 = vsyncpa %s11, 0
    loop: start=0, step=1, limit=4
    $region2: #{tpu_custom_call.1} parent=1 // loop_pre_header
      _
    $region3: #{tpu_custom_call.1} parent=1 // loop_header
      %s14 = sphi 0, %s18
      %p15 = scmp.ge.s32.totalorder %s14, 4
      %s21 = sphi 0, %s40
      %s22 = sphi 0, %s36
      %s23 = sphi 0, %s32
      %s24 = sphi 0, %s21
      %s25 = sphi 0, %s22
      %s26 = sphi 0, %s23
      %s27 = sphi 0, %s24
      %s28 = sphi 0, %s25
      %s29 = sphi 0, %s26
      %s45 = sphi 0, %s47
      %s48 = sphi 0, %s45
      %s49 = sphi 0, %s48
      %s65 = sphi 0, %s49
      %s73 = sphi 0, %s75
      %s76 = sphi 0, %s73
      %s77 = sphi 0, %s76
      %s93 = sphi 0, %s77
      %s99 = sphi 0, %s101
      %s102 = sphi 0, %s99
      %s103 = sphi 0, %s102
      %s119 = sphi 0, %s103
      %s125 = sphi 0, %s127
      %s128 = sphi 0, %s125
      %s129 = sphi 0, %s128
      %s145 = sphi 0, %s129
      %s151 = sphi 0, %s153
      %s154 = sphi 0, %s151
      %s155 = sphi 0, %s154
      %s171 = sphi 0, %s155
      %s179 = sphi 0, %s181
      %s182 = sphi 0, %s179
      %s183 = sphi 0, %s182
      %s199 = sphi 0, %s183
    $region4: #{tpu_custom_call.1} parent=1 // loop_header_branch
      %17 = sbr.rel (%p15) target = $region8
    $region5: #{tpu_custom_call.1} parent=1 // loop_body
      %s19 = ssub.s32 %s14, 1
      %s20 = ssub.s32 %s14, 2
      %s30 = sadd.s32 1, %s23
      %p31 = scmp.ge.s32.totalorder %s30, 1
      %s32 = scalar_select %p31, 0, %s30
      %s33 = sadd.s32 1, %s22
      %s34 = scalar_select %p31, %s33, %s22
      %p35 = scmp.ge.s32.totalorder %s34, 1
      %s36 = scalar_select %p35, 0, %s34
      %s37 = sadd.s32 1, %s21
      %s38 = scalar_select %p35, %s37, %s21
      %p39 = scmp.ge.s32.totalorder %s38, 2
      %s40 = scalar_select %p39, 0, %s38
      %s41 = ssub.s32 %s21, %s40
      %s42 = ssub.s32 %s23, %s32
      %s43 = sor.u32 %s41, %s42
      %p44 = scmp.eq.s32.totalorder %s43, 0
      %s46 = sadd.s32 %s45, 1
      %s47 = scalar_select %p44, %s45, %s46
      %p50 = pneg %p44
      %p51 = scmp.eq.s32.totalorder %s14, 1
      %p52 = por %p50, %p51
      %p53 = scmp.ne.s32.totalorder %s45, %s48
      %p54 = scmp.eq.s32.totalorder %s14, 0
      %p55 = por %p53, %p54
      %p56 = scmp.ne.s32.totalorder %s45, %s48
      %p57 = scmp.eq.s32.totalorder %s19, 1
      %p58 = por %p56, %p57
      %p59 = scmp.ne.s32.totalorder %s48, %s49
      %p60 = scmp.eq.s32.totalorder %s19, 0
      %p61 = por %p59, %p60
      %p62 = scmp.ne.s32.totalorder %s48, %s49
      %p63 = scmp.eq.s32.totalorder %s20, 1
      %p64 = por %p62, %p63
      %p66 = scmp.ne.s32.totalorder %s49, %s65
      %p67 = scmp.eq.s32.totalorder %s20, 0
      %p68 = por %p66, %p67
      %s69 = ssub.s32 %s22, %s36
      %s70 = ssub.s32 %s23, %s32
      %s71 = sor.u32 %s69, %s70
      %p72 = scmp.eq.s32.totalorder %s71, 0
      %s74 = sadd.s32 %s73, 1
      %s75 = scalar_select %p72, %s73, %s74
      %p78 = pneg %p72
      %p79 = scmp.eq.s32.totalorder %s14, 1
      %p80 = por %p78, %p79
      %p81 = scmp.ne.s32.totalorder %s73, %s76
      %p82 = scmp.eq.s32.totalorder %s14, 0
      %p83 = por %p81, %p82
      %p84 = scmp.ne.s32.totalorder %s73, %s76
      %p85 = scmp.eq.s32.totalorder %s19, 1
      %p86 = por %p84, %p85
      %p87 = scmp.ne.s32.totalorder %s76, %s77
      %p88 = scmp.eq.s32.totalorder %s19, 0
      %p89 = por %p87, %p88
      %p90 = scmp.ne.s32.totalorder %s76, %s77
      %p91 = scmp.eq.s32.totalorder %s20, 1
      %p92 = por %p90, %p91
      %p94 = scmp.ne.s32.totalorder %s77, %s93
      %p95 = scmp.eq.s32.totalorder %s20, 0
      %p96 = por %p94, %p95
      %s97 = ssub.s32 %s22, %s36
      %p98 = scmp.eq.s32.totalorder %s97, 0
      %s100 = sadd.s32 %s99, 1
      %s101 = scalar_select %p98, %s99, %s100
      %p104 = pneg %p98
      %p105 = scmp.eq.s32.totalorder %s14, 1
      %p106 = por %p104, %p105
      %p107 = scmp.ne.s32.totalorder %s99, %s102
      %p108 = scmp.eq.s32.totalorder %s14, 0
      %p109 = por %p107, %p108
      %p110 = scmp.ne.s32.totalorder %s99, %s102
      %p111 = scmp.eq.s32.totalorder %s19, 1
      %p112 = por %p110, %p111
      %p113 = scmp.ne.s32.totalorder %s102, %s103
      %p114 = scmp.eq.s32.totalorder %s19, 0
      %p115 = por %p113, %p114
      %p116 = scmp.ne.s32.totalorder %s102, %s103
      %p117 = scmp.eq.s32.totalorder %s20, 1
      %p118 = por %p116, %p117
      %p120 = scmp.ne.s32.totalorder %s103, %s119
      %p121 = scmp.eq.s32.totalorder %s20, 0
      %p122 = por %p120, %p121
      %s123 = ssub.s32 %s21, %s40
      %p124 = scmp.eq.s32.totalorder %s123, 0
      %s126 = sadd.s32 %s125, 1
      %s127 = scalar_select %p124, %s125, %s126
      %p130 = pneg %p124
      %p131 = scmp.eq.s32.totalorder %s14, 1
      %p132 = por %p130, %p131
      %p133 = scmp.ne.s32.totalorder %s125, %s128
      %p134 = scmp.eq.s32.totalorder %s14, 0
      %p135 = por %p133, %p134
      %p136 = scmp.ne.s32.totalorder %s125, %s128
      %p137 = scmp.eq.s32.totalorder %s19, 1
      %p138 = por %p136, %p137
      %p139 = scmp.ne.s32.totalorder %s128, %s129
      %p140 = scmp.eq.s32.totalorder %s19, 0
      %p141 = por %p139, %p140
      %p142 = scmp.ne.s32.totalorder %s128, %s129
      %p143 = scmp.eq.s32.totalorder %s20, 1
      %p144 = por %p142, %p143
      %p146 = scmp.ne.s32.totalorder %s129, %s145
      %p147 = scmp.eq.s32.totalorder %s20, 0
      %p148 = por %p146, %p147
      %s149 = ssub.s32 %s22, %s36
      %p150 = scmp.eq.s32.totalorder %s149, 0
      %s152 = sadd.s32 %s151, 1
      %s153 = scalar_select %p150, %s151, %s152
      %p156 = pneg %p150
      %p157 = scmp.eq.s32.totalorder %s14, 1
      %p158 = por %p156, %p157
      %p159 = scmp.ne.s32.totalorder %s151, %s154
      %p160 = scmp.eq.s32.totalorder %s14, 0
      %p161 = por %p159, %p160
      %p162 = scmp.ne.s32.totalorder %s151, %s154
      %p163 = scmp.eq.s32.totalorder %s19, 1
      %p164 = por %p162, %p163
      %p165 = scmp.ne.s32.totalorder %s154, %s155
      %p166 = scmp.eq.s32.totalorder %s19, 0
      %p167 = por %p165, %p166
      %p168 = scmp.ne.s32.totalorder %s154, %s155
      %p169 = scmp.eq.s32.totalorder %s20, 1
      %p170 = por %p168, %p169
      %p172 = scmp.ne.s32.totalorder %s155, %s171
      %p173 = scmp.eq.s32.totalorder %s20, 0
      %p174 = por %p172, %p173
      %s175 = ssub.s32 %s21, %s40
      %s176 = ssub.s32 %s22, %s36
      %s177 = sor.u32 %s175, %s176
      %p178 = scmp.eq.s32.totalorder %s177, 0
      %s180 = sadd.s32 %s179, 1
      %s181 = scalar_select %p178, %s179, %s180
      %p184 = pneg %p178
      %p185 = scmp.eq.s32.totalorder %s14, 1
      %p186 = por %p184, %p185
      %p187 = scmp.ne.s32.totalorder %s179, %s182
      %p188 = scmp.eq.s32.totalorder %s14, 0
      %p189 = por %p187, %p188
      %p190 = scmp.ne.s32.totalorder %s179, %s182
      %p191 = scmp.eq.s32.totalorder %s19, 1
      %p192 = por %p190, %p191
      %p193 = scmp.ne.s32.totalorder %s182, %s183
      %p194 = scmp.eq.s32.totalorder %s19, 0
      %p195 = por %p193, %p194
      %p196 = scmp.ne.s32.totalorder %s182, %s183
      %p197 = scmp.eq.s32.totalorder %s20, 1
      %p198 = por %p196, %p197
      %p200 = scmp.ne.s32.totalorder %s183, %s199
      %p201 = scmp.eq.s32.totalorder %s20, 0
      %p202 = por %p200, %p201
      %p203 = scmp.le.s32.totalorder 1, %s14
      %p204 = scmp.lt.s32.totalorder %s14, 3
      %p205 = pnand %p203, %p204
      %p206 = pneg %p205
      // Predicated region
      $region9: #{tpu_custom_call.1} parent=5 // pred_check
        _
      $region10: #{tpu_custom_call.1} parent=5 // pred_check_branch
        %208 = sbr.rel (%p205) target = $region12
      $region11: #{tpu_custom_call.1} parent=5 // pred_region
        %s209 = ssub.s32 %s14, 1
        // Predicated region
        $region13: #{tpu_custom_call.1} parent=11 // pred_check
          %p210 = pneg %p89
        $region14: #{tpu_custom_call.1} parent=11 // pred_check_branch
          %212 = sbr.rel (%p210) target = $region16
        $region15: #{tpu_custom_call.1} parent=11 // pred_region
          %s213 = smul.u32 16, %s25
          %p214 = scmp.lt.s32.totalorder %s213, 15
          %s215 = scalar_select %p214, %s213, 15
          %p216 = scmp.lt.s32.totalorder %s26, 0
          %s217 = scalar_select %p216, %s26, 0
          %s218 = sadd.s32 %s217, %s215
          %s219 = smul.addr %s218, 8
          %s220 = scalar_lea.vmem %s1, %s219
          %s221 = smul.u32 16, %s25
        $region16: #{tpu_custom_call.1} parent=11 // pred_fallthru
          _
        // Predicated region
        $region17: #{tpu_custom_call.1} parent=11 // pred_check
          %p222 = pneg %p115
        $region18: #{tpu_custom_call.1} parent=11 // pred_check_branch
          %224 = sbr.rel (%p222) target = $region20
        $region19: #{tpu_custom_call.1} parent=11 // pred_region
          %p225 = scmp.lt.s32.totalorder %s25, 0
          %s226 = scalar_select %p225, %s25, 0
          %s227 = scalar_lea.vmem %s2, %s226
        $region20: #{tpu_custom_call.1} parent=11 // pred_fallthru
          _
        // Predicated region
        $region21: #{tpu_custom_call.1} parent=11 // pred_check
          %p228 = pneg %p167
        $region22: #{tpu_custom_call.1} parent=11 // pred_check_branch
          %230 = sbr.rel (%p228) target = $region24
        $region23: #{tpu_custom_call.1} parent=11 // pred_region
          %s231 = smul.u32 16, %s25
          %p232 = scmp.lt.s32.totalorder %s231, 15
          %s233 = scalar_select %p232, %s231, 15
          %s234 = smul.addr %s233, 8
          %s235 = scalar_lea.vmem %s4, %s234
          %s236 = smul.u32 16, %s25
        $region24: #{tpu_custom_call.1} parent=11 // pred_fallthru
          _
      $region12: #{tpu_custom_call.1} parent=5 // pred_fallthru
        _
      %p237 = scmp.lt.s32.totalorder %s14, 2
      // Predicated region
      $region25: #{tpu_custom_call.1} parent=5 // pred_check
        %p238 = pneg %p237
      $region26: #{tpu_custom_call.1} parent=5 // pred_check_branch
        %240 = sbr.rel (%p238) target = $region28
      $region27: #{tpu_custom_call.1} parent=5 // pred_region
        // Predicated region
        $region29: #{tpu_custom_call.1} parent=27 // pred_check
          %p241 = pneg %p55
        $region30: #{tpu_custom_call.1} parent=27 // pred_check_branch
          %243 = sbr.rel (%p241) target = $region32
        $region31: #{tpu_custom_call.1} parent=27 // pred_region
          %p244 = scmp.lt.s32.totalorder %s21, 1
          %s245 = scalar_select %p244, %s21, 1
          %p246 = scmp.lt.s32.totalorder %s23, 0
          %s247 = scalar_select %p246, %s23, 0
          %s248 = sadd.s32 %s247, %s245
          %s249 = smul.addr %s248, 8
          %s250 = scalar_lea.vmem %s0, %s249
        $region32: #{tpu_custom_call.1} parent=27 // pred_fallthru
          _
        // Predicated region
        $region33: #{tpu_custom_call.1} parent=27 // pred_check
          %p251 = pneg %p135
        $region34: #{tpu_custom_call.1} parent=27 // pred_check_branch
          %253 = sbr.rel (%p251) target = $region36
        $region35: #{tpu_custom_call.1} parent=27 // pred_region
          %p254 = scmp.lt.s32.totalorder %s21, 1
          %s255 = scalar_select %p254, %s21, 1
          %s256 = smul.addr %s255, 8
          %s257 = scalar_lea.vmem %s3, %s256
        $region36: #{tpu_custom_call.1} parent=27 // pred_fallthru
          _
      $region28: #{tpu_custom_call.1} parent=5 // pred_fallthru
        _
      %p258 = scmp.le.s32.totalorder 1, %s14
      %p259 = scmp.lt.s32.totalorder %s14, 3
      %p260 = pnand %p258, %p259
      %p261 = pneg %p260
      // Predicated region
      $region37: #{tpu_custom_call.1} parent=5 // pred_check
        _
      $region38: #{tpu_custom_call.1} parent=5 // pred_check_branch
        %263 = sbr.rel (%p260) target = $region40
      $region39: #{tpu_custom_call.1} parent=5 // pred_region
        %s264 = ssub.s32 %s14, 1
        %p265 = scmp.lt.s32.totalorder %s24, 1
        %s266 = scalar_select %p265, %s24, 1
        %p267 = scmp.lt.s32.totalorder %s26, 0
        %s268 = scalar_select %p267, %s26, 0
        %s269 = sadd.s32 %s268, %s266
        %s270 = smul.addr %s269, 8
        %s271 = scalar_lea.vmem %s0, %s270
        %p272 = pneg %p61
        %p273 = pneg %p58
        %s274 = smul.u32 16, %s25
        %p275 = scmp.lt.s32.totalorder %s274, 15
        %s276 = scalar_select %p275, %s274, 15
        %p277 = scmp.lt.s32.totalorder %s26, 0
        %s278 = scalar_select %p277, %s26, 0
        %s279 = sadd.s32 %s278, %s276
        %s280 = smul.addr %s279, 8
        %s281 = scalar_lea.vmem %s1, %s280
        %p282 = pneg %p89
        %p283 = pneg %p86
        %p284 = scmp.lt.s32.totalorder %s25, 0
        %s285 = scalar_select %p284, %s25, 0
        %s286 = scalar_lea.vmem %s2, %s285
        %p287 = pneg %p115
        %p288 = pneg %p112
        %p289 = scmp.lt.s32.totalorder %s24, 1
        %s290 = scalar_select %p289, %s24, 1
        %s291 = smul.addr %s290, 8
        %s292 = scalar_lea.vmem %s3, %s291
        %p293 = pneg %p141
        %p294 = pneg %p138
        %s295 = smul.u32 16, %s25
        %p296 = scmp.lt.s32.totalorder %s295, 15
        %s297 = scalar_select %p296, %s295, 15
        %s298 = smul.addr %s297, 8
        %s299 = scalar_lea.vmem %s4, %s298
        %p300 = pneg %p167
        %p301 = pneg %p164
        %p302 = pneg %p195
        %p303 = pneg %p192
        %s304 = sand.u32 %s182, 1
        %s305 = scalar_lea.sflag [#allocation3], %s304
        %s306 = sand.u32 %s182, 1
        %s307 = smul.addr %s306, 8
        %s308 = scalar_lea.vmem [#allocation2], %s307
        %p309 = scmp.lt.s32.totalorder %s24, 1
        %s310 = scalar_select %p309, %s24, 1
        %p311 = scmp.lt.s32.totalorder %s26, 0
        %s312 = scalar_select %p311, %s26, 0
        %s313 = sadd.s32 %s312, %s310
        %s314 = smul.addr %s313, 8
        %s315 = scalar_lea.vmem %s0, %s314
        %s316 = smul.u32 16, %s25
        %p317 = scmp.lt.s32.totalorder %s316, 15
        %s318 = scalar_select %p317, %s316, 15
        %p319 = scmp.lt.s32.totalorder %s26, 0
        %s320 = scalar_select %p319, %s26, 0
        %s321 = sadd.s32 %s320, %s318
        %s322 = smul.addr %s321, 8
        %s323 = scalar_lea.vmem %s1, %s322
        %s324 = smul.u32 16, %s25
        %p325 = scmp.lt.s32.totalorder %s25, 0
        %s326 = scalar_select %p325, %s25, 0
        %s327 = scalar_lea.vmem %s2, %s326
        %p328 = scmp.lt.s32.totalorder %s24, 1
        %s329 = scalar_select %p328, %s24, 1
        %s330 = smul.addr %s329, 8
        %s331 = scalar_lea.vmem %s3, %s330
        %s332 = smul.u32 16, %s25
        %p333 = scmp.lt.s32.totalorder %s332, 15
        %s334 = scalar_select %p333, %s332, 15
        %s335 = smul.addr %s334, 8
        %s336 = scalar_lea.vmem %s4, %s335
        %s337 = smul.u32 16, %s25
        %p338 = scmp.eq.s32.totalorder %s26, 0
        // Predicated region
        $region41: #{tpu_custom_call.1} parent=39 // pred_check
          %p339 = pneg %p338
        $region42: #{tpu_custom_call.1} parent=39 // pred_check_branch
          %341 = sbr.rel (%p339) target = $region44
        $region43: #{tpu_custom_call.1} parent=39 // pred_region
          %v342 = vld [vmem:[%s327] sm:$0x1]
          %v344 = vlaneseq
          %v345 = vshrl.u32 %v344, 7
          %v346 = vsub.s32 0, %v345
          %v347 = vrot.slane %v342, %v346
          %v349 = vld [vmem:[%s331] sm:$0xff]
          %v350 = vld [vmem:[%s336] sm:$0xff]
          %v351 = vld [vmem:[%s336 + $0x8] sm:$0xff]
          %v352 = vld [vmem:[%s336 + $0x10] sm:$0xff]
          %v353 = vld [vmem:[%s336 + $0x18] sm:$0xff]
          %v354 = vld [vmem:[%s336 + $0x20] sm:$0xff]
          %v355 = vld [vmem:[%s336 + $0x28] sm:$0xff]
          %v356 = vld [vmem:[%s336 + $0x30] sm:$0xff]
          %v357 = vld [vmem:[%s336 + $0x38] sm:$0xff]
          %v358 = vld [vmem:[%s336 + $0x40] sm:$0xff]
          %v359 = vld [vmem:[%s336 + $0x48] sm:$0xff]
          %v360 = vld [vmem:[%s336 + $0x50] sm:$0xff]
          %v361 = vld [vmem:[%s336 + $0x58] sm:$0xff]
          %v362 = vld [vmem:[%s336 + $0x60] sm:$0xff]
          %v363 = vld [vmem:[%s336 + $0x68] sm:$0xff]
          %v364 = vld [vmem:[%s336 + $0x70] sm:$0xff]
          %v365 = vld [vmem:[%s336 + $0x78] sm:$0xff]
          %vm366 = vcmask 31744
          %v368 = vsel %vm366, %v349, 0
          %v371 = vsel %vm366, %v350, 0
          %v374 = vsel %vm366, %v351, 0
          %v377 = vsel %vm366, %v352, 0
          %v380 = vsel %vm366, %v353, 0
          %v383 = vsel %vm366, %v354, 0
          %v386 = vsel %vm366, %v355, 0
          %v389 = vsel %vm366, %v356, 0
          %v392 = vsel %vm366, %v357, 0
          %v395 = vsel %vm366, %v358, 0
          %v398 = vsel %vm366, %v359, 0
          %v401 = vsel %vm366, %v360, 0
          %v404 = vsel %vm366, %v361, 0
          %v407 = vsel %vm366, %v362, 0
          %v410 = vsel %vm366, %v363, 0
          %v413 = vsel %vm366, %v364, 0
          %v416 = vsel %vm366, %v365, 0
          %418 = vmatprep.subr.mxu0 0.0
          %419 = vmatpush1.xpose.msra.mxu0 %v371
          %420 = vmatprep.subr.mxu0 0.0
          %421 = vmatpush1.xpose.msra.mxu0 %v374
          %422 = vmatprep.subr.mxu0 0.0
          %423 = vmatpush1.xpose.msra.mxu0 %v377
          %424 = vmatprep.subr.mxu0 0.0
          %425 = vmatpush1.xpose.msra.mxu0 %v380
          %426 = vmatprep.subr.mxu0 0.0
          %427 = vmatpush1.xpose.msra.mxu0 %v383
          %428 = vmatprep.subr.mxu0 0.0
          %429 = vmatpush1.xpose.msra.mxu0 %v386
          %430 = vmatprep.subr.mxu0 0.0
          %431 = vmatpush1.xpose.msra.mxu0 %v389
          %432 = vmatprep.subr.mxu0 0.0
          %433 = vmatpush1.xpose.msra.mxu0 %v392
          %434 = vmatprep.subr.mxu0 0.0
          %435 = vmatpush1.xpose.msra.mxu0 %v395
          %436 = vmatprep.subr.mxu0 0.0
          %437 = vmatpush1.xpose.msra.mxu0 %v398
          %438 = vmatprep.subr.mxu0 0.0
          %439 = vmatpush1.xpose.msra.mxu0 %v401
          %440 = vmatprep.subr.mxu0 0.0
          %441 = vmatpush1.xpose.msra.mxu0 %v404
          %442 = vmatprep.subr.mxu0 0.0
          %443 = vmatpush1.xpose.msra.mxu0 %v407
          %444 = vmatprep.subr.mxu0 0.0
          %445 = vmatpush1.xpose.msra.mxu0 %v410
          %446 = vmatprep.subr.mxu0 0.0
          %447 = vmatpush1.xpose.msra.mxu0 %v413
          %448 = vmatprep.subr.mxu0 0.0
          %449 = vmatpush1.xpose.msra.mxu0 %v416
          %450 = vmatprep.subr.mxu0 0.0
          %451 = vmatpush1.xpose.msra.mxu0 0.0
          %452 = vmatprep.subr.mxu0 0.0
          %453 = vmatpush1.xpose.msra.mxu0 0.0
          %454 = vmatprep.subr.mxu0 0.0
          %455 = vmatpush1.xpose.msra.mxu0 0.0
          %456 = vmatprep.subr.mxu0 0.0
          %457 = vmatpush1.xpose.msra.mxu0 0.0
          %458 = vmatprep.subr.mxu0 0.0
          %459 = vmatpush1.xpose.msra.mxu0 0.0
          %460 = vmatprep.subr.mxu0 0.0
          %461 = vmatpush1.xpose.msra.mxu0 0.0
          %462 = vmatprep.subr.mxu0 0.0
          %463 = vmatpush1.xpose.msra.mxu0 0.0
          %464 = vmatprep.subr.mxu0 0.0
          %465 = vmatpush1.xpose.msra.mxu0 0.0
          %466 = vmatprep.subr.mxu0 0.0
          %467 = vmatpush1.xpose.msra.mxu0 0.0
          %468 = vmatprep.subr.mxu0 0.0
          %469 = vmatpush1.xpose.msra.mxu0 0.0
          %470 = vmatprep.subr.mxu0 0.0
          %471 = vmatpush1.xpose.msra.mxu0 0.0
          %472 = vmatprep.subr.mxu0 0.0
          %473 = vmatpush1.xpose.msra.mxu0 0.0
          %474 = vmatprep.subr.mxu0 0.0
          %475 = vmatpush1.xpose.msra.mxu0 0.0
          %476 = vmatprep.subr.mxu0 0.0
          %477 = vmatpush1.xpose.msra.mxu0 0.0
          %478 = vmatprep.subr.mxu0 0.0
          %479 = vmatpush1.xpose.msra.mxu0 0.0
          %480 = vmatprep.subr.mxu0 0.0
          %481 = vmatpush1.xpose.msra.mxu0 0.0
          %482 = vmatprep.mubr.f32.mxu0 0.0
          %483 = vmatmul.mubr.f32.gmra.mrb[0].mxu0 %v368
          %v484 = vpop.f32.mrb[0].mxu0
          %v485 = vadd.f32 0.0, %v484
          %v486 = vpop.f32.mrb[0].mxu0
          %487 = vdwg.mxu0
          %v488 = vadd.f32 %v347, %v485
          %489 = vst [vmem:[%s308] sm:$0xff] %v488
        $region44: #{tpu_custom_call.1} parent=39 // pred_fallthru
          _
        %v490 = vld [vmem:[%s308] sm:$0xff]
        %v491 = vld [vmem:[%s315] sm:$0xff]
        %v492 = vld [vmem:[%s323] sm:$0xff]
        %v493 = vld [vmem:[%s323 + $0x8] sm:$0xff]
        %v494 = vld [vmem:[%s323 + $0x10] sm:$0xff]
        %v495 = vld [vmem:[%s323 + $0x18] sm:$0xff]
        %v496 = vld [vmem:[%s323 + $0x20] sm:$0xff]
        %v497 = vld [vmem:[%s323 + $0x28] sm:$0xff]
        %v498 = vld [vmem:[%s323 + $0x30] sm:$0xff]
        %v499 = vld [vmem:[%s323 + $0x38] sm:$0xff]
        %v500 = vld [vmem:[%s323 + $0x40] sm:$0xff]
        %v501 = vld [vmem:[%s323 + $0x48] sm:$0xff]
        %v502 = vld [vmem:[%s323 + $0x50] sm:$0xff]
        %v503 = vld [vmem:[%s323 + $0x58] sm:$0xff]
        %v504 = vld [vmem:[%s323 + $0x60] sm:$0xff]
        %v505 = vld [vmem:[%s323 + $0x68] sm:$0xff]
        %v506 = vld [vmem:[%s323 + $0x70] sm:$0xff]
        %v507 = vld [vmem:[%s323 + $0x78] sm:$0xff]
        %508 = vmatprep.subr.mxu0 0.0
        %509 = vmatpush1.xpose.msra.mxu0 %v492
        %510 = vmatprep.subr.mxu0 0.0
        %511 = vmatpush1.xpose.msra.mxu0 %v493
        %512 = vmatprep.subr.mxu0 0.0
        %513 = vmatpush1.xpose.msra.mxu0 %v494
        %514 = vmatprep.subr.mxu0 0.0
        %515 = vmatpush1.xpose.msra.mxu0 %v495
        %516 = vmatprep.subr.mxu0 0.0
        %517 = vmatpush1.xpose.msra.mxu0 %v496
        %518 = vmatprep.subr.mxu0 0.0
        %519 = vmatpush1.xpose.msra.mxu0 %v497
        %520 = vmatprep.subr.mxu0 0.0
        %521 = vmatpush1.xpose.msra.mxu0 %v498
        %522 = vmatprep.subr.mxu0 0.0
        %523 = vmatpush1.xpose.msra.mxu0 %v499
        %524 = vmatprep.subr.mxu0 0.0
        %525 = vmatpush1.xpose.msra.mxu0 %v500
        %526 = vmatprep.subr.mxu0 0.0
        %527 = vmatpush1.xpose.msra.mxu0 %v501
        %528 = vmatprep.subr.mxu0 0.0
        %529 = vmatpush1.xpose.msra.mxu0 %v502
        %530 = vmatprep.subr.mxu0 0.0
        %531 = vmatpush1.xpose.msra.mxu0 %v503
        %532 = vmatprep.subr.mxu0 0.0
        %533 = vmatpush1.xpose.msra.mxu0 %v504
        %534 = vmatprep.subr.mxu0 0.0
        %535 = vmatpush1.xpose.msra.mxu0 %v505
        %536 = vmatprep.subr.mxu0 0.0
        %537 = vmatpush1.xpose.msra.mxu0 %v506
        %538 = vmatprep.subr.mxu0 0.0
        %539 = vmatpush1.xpose.msra.mxu0 %v507
        %540 = vmatprep.subr.mxu0 0.0
        %541 = vmatpush1.xpose.msra.mxu0 0.0
        %542 = vmatprep.subr.mxu0 0.0
        %543 = vmatpush1.xpose.msra.mxu0 0.0
        %544 = vmatprep.subr.mxu0 0.0
        %545 = vmatpush1.xpose.msra.mxu0 0.0
        %546 = vmatprep.subr.mxu0 0.0
        %547 = vmatpush1.xpose.msra.mxu0 0.0
        %548 = vmatprep.subr.mxu0 0.0
        %549 = vmatpush1.xpose.msra.mxu0 0.0
        %550 = vmatprep.subr.mxu0 0.0
        %551 = vmatpush1.xpose.msra.mxu0 0.0
        %552 = vmatprep.subr.mxu0 0.0
        %553 = vmatpush1.xpose.msra.mxu0 0.0
        %554 = vmatprep.subr.mxu0 0.0
        %555 = vmatpush1.xpose.msra.mxu0 0.0
        %556 = vmatprep.subr.mxu0 0.0
        %557 = vmatpush1.xpose.msra.mxu0 0.0
        %558 = vmatprep.subr.mxu0 0.0
        %559 = vmatpush1.xpose.msra.mxu0 0.0
        %560 = vmatprep.subr.mxu0 0.0
        %561 = vmatpush1.xpose.msra.mxu0 0.0
        %562 = vmatprep.subr.mxu0 0.0
        %563 = vmatpush1.xpose.msra.mxu0 0.0
        %564 = vmatprep.subr.mxu0 0.0
        %565 = vmatpush1.xpose.msra.mxu0 0.0
        %566 = vmatprep.subr.mxu0 0.0
        %567 = vmatpush1.xpose.msra.mxu0 0.0
        %568 = vmatprep.subr.mxu0 0.0
        %569 = vmatpush1.xpose.msra.mxu0 0.0
        %570 = vmatprep.subr.mxu0 0.0
        %571 = vmatpush1.xpose.msra.mxu0 0.0
        %572 = vmatprep.mubr.f32.mxu0 0.0
        %573 = vmatmul.mubr.f32.gmra.mrb[0].mxu0 %v491
        %v574 = vpop.f32.mrb[0].mxu0
        %v575 = vadd.f32 0.0, %v574
        %v576 = vpop.f32.mrb[0].mxu0
        %577 = vdwg.mxu0
        %v578 = vadd.f32 %v490, %v575
        %579 = vst [vmem:[%s308] sm:$0xff] %v578
        %s580 = sand.u32 %s182, 1
        %s581 = scalar_lea.sflag [#allocation3], %s580
        %s582 = sand.u32 %s182, 1
        %s583 = smul.addr %s582, 8
        %s584 = scalar_lea.vmem [#allocation2], %s583
        // Predicated region
        $region45: #{tpu_custom_call.1} parent=39 // pred_check
          %p585 = pneg %p192
        $region46: #{tpu_custom_call.1} parent=39 // pred_check_branch
          %587 = sbr.rel (%p585) target = $region48
        $region47: #{tpu_custom_call.1} parent=39 // pred_region
          %s589 = ssub.s32 128, 128
          %590 = vsyncadd %s581, %s589
          %s591 = sadd.s32 %s25, %s24
          %s592 = smul.addr %s591, 128
          %s593 = scalar_lea.hbm %s5, %s592
          %s595 = sshll.u32 %s584, 4
          %s596 = int_to_ptr.vmem [resolvable:$true] %s595
          %598 = dma.vmem_to_hbm [thread:$0]  %s596, 128, %s593, %s581
        $region48: #{tpu_custom_call.1} parent=39 // pred_fallthru
          _
      $region40: #{tpu_custom_call.1} parent=5 // pred_fallthru
        _
      %p599 = scmp.le.s32.totalorder 2, %s14
      // Predicated region
      $region49: #{tpu_custom_call.1} parent=5 // pred_check
        %p600 = pneg %p599
      $region50: #{tpu_custom_call.1} parent=5 // pred_check_branch
        %602 = sbr.rel (%p600) target = $region52
      $region51: #{tpu_custom_call.1} parent=5 // pred_region
        %s603 = ssub.s32 %s14, 2
        // Predicated region
        $region53: #{tpu_custom_call.1} parent=51 // pred_check
          %p604 = pneg %p198
        $region54: #{tpu_custom_call.1} parent=51 // pred_check_branch
          %606 = sbr.rel (%p604) target = $region56
        $region55: #{tpu_custom_call.1} parent=51 // pred_region
          %s607 = sand.u32 %s183, 1
          %s608 = scalar_lea.sflag [#allocation3], %s607
          %s609 = sand.u32 %s183, 1
          %s610 = smul.addr %s609, 8
          %s611 = scalar_lea.vmem [#allocation2], %s610
          %612 = dma.done %s608, 128
        $region56: #{tpu_custom_call.1} parent=51 // pred_fallthru
          _
      $region52: #{tpu_custom_call.1} parent=5 // pred_fallthru
        _
    $region6: #{tpu_custom_call.1} parent=1 // loop_footer
      %s18 = sadd.s32 1, %s14
    $region7: #{tpu_custom_call.1} parent=1 // loop_footer_branch
      %13 = sbr.rel target = $region3
    $region8: #{tpu_custom_call.1} parent=1 // loop_exit
      _
    %613 = vsyncpa [#allocation3], 1
    %s614 = scalar_lea.sflag [#allocation3], 1
    %615 = vsyncpa %s614, 1

</llo_original>
